<compile_context>
chip_gen: v6e
topology: v6e:2x2x1
jax: 0.10.0
libtpu: 0.0.40
codegen_flags: <defaults>
</compile_context>

<pallas_src>
import jax
import jax.numpy as jnp
from jax.experimental import pallas as pl
from jax.experimental.pallas import tpu as pltpu

_LANE = 128
_SUBLANE_BF16 = 16   # bf16 packs 2 rows/sublane -> native (16, 128) tile


def _round_up(x, m):
    return ((x + m - 1) // m) * m


# ----------------------------------------------------------------------------
# Pallas kernel: fused 2-layer MLP  (Linear -> ReLU -> Linear)
#   x_ref : (TB, D_in)      f32   streamed per grid step (cast to bf16 in-kernel)
#   w1_ref: (D_in, H_pad)   bf16  resident (hidden zero-padded to 128)
#   b1_ref: (1, H_pad)      f32   resident
#   w2_ref: (H_pad, A_pad)  bf16  resident (zero rows / zero cols in padding)
#   b2_ref: (1, A_pad)      f32   resident
#   o_ref : (TB, A_pad)     bf16  streamed per grid step (lane-dense store)
# ----------------------------------------------------------------------------
def _mlp_policy_kernel(x_ref, w1_ref, b1_ref, w2_ref, b2_ref, o_ref):
    # Cast the streamed f32 x tile to bf16 right at the MXU input.
    x = x_ref[...].astype(jnp.bfloat16)
    # Hidden layer on the MXU: bf16 operands, f32 accumulation.
    h = jnp.dot(x, w1_ref[...], preferred_element_type=jnp.float32)
    # Bias add + ReLU stay in f32 on the VPU (v5e has no bf16 elementwise path).
    h = jnp.maximum(h + b1_ref[...], 0.0)
    # Output layer; final_activation=None -> raw linear output.
    o = jnp.dot(h.astype(jnp.bfloat16), w2_ref[...],
                preferred_element_type=jnp.float32)
    o = o + b2_ref[...]
    # Pack to bf16 only at the final store: halves the output HBM writeback.
    o_ref[...] = o.astype(o_ref.dtype)


# ----------------------------------------------------------------------------
# One-time parameter prep (hoisted out of the per-call forward path).
# ----------------------------------------------------------------------------
def prepare_policy_params(w1, b1, w2, b2):
    d_in, hidden = w1.shape
    n_actions = w2.shape[1]
    h_pad = _round_up(hidden, _LANE)               # lane-dense hidden activations
    a_pad = _round_up(max(n_actions, 1), _LANE)    # lane-dense (unmasked) output

    w1_b = jnp.zeros((d_in, h_pad), jnp.bfloat16).at[:, :hidden].set(
        jnp.asarray(w1, jnp.float32).astype(jnp.bfloat16))
    b1_f = jnp.zeros((1, h_pad), jnp.float32).at[:, :hidden].set(
        jnp.asarray(b1, jnp.float32).reshape(1, hidden))
    w2_b = jnp.zeros((h_pad, a_pad), jnp.bfloat16).at[:hidden, :n_actions].set(
        jnp.asarray(w2, jnp.float32).astype(jnp.bfloat16))
    b2_f = jnp.zeros((1, a_pad), jnp.float32).at[:, :n_actions].set(
        jnp.asarray(b2, jnp.float32).reshape(1, n_actions))

    return dict(w1=w1_b, b1=b1_f, w2=w2_b, b2=b2_f,
                d_in=d_in, n_actions=n_actions, h_pad=h_pad, a_pad=a_pad)


# ----------------------------------------------------------------------------
# Per-call forward: only streams x and the output; weights are pre-padded.
# ----------------------------------------------------------------------------
def deterministic_policy_forward(x, params, *, block_b=2048):
    """x: (B, D_in) f32; params: output of prepare_policy_params."""
    x = jnp.asarray(x, jnp.float32)
    B, d_in = x.shape
    assert d_in == params["d_in"], "input feature dim mismatch"
    h_pad = params["h_pad"]
    a_pad = params["a_pad"]
    n_actions = params["n_actions"]

    # Batch tile: multiple of 16 (bf16 row pairs), capped at block_b, and
    # sized so the grid has >= 2 steps whenever B allows (v7x: both TCs busy).
    tb = max(_SUBLANE_BF16,
             min(_round_up(block_b, _SUBLANE_BF16),
                 _round_up(pl.cdiv(B, 2), _SUBLANE_BF16)))
    grid_b = pl.cdiv(B, tb)   # ragged last block: OOB reads padded, writes dropped

    flops = 2 * B * (d_in * h_pad + h_pad * a_pad)
    bytes_accessed = (B * d_in * 4 + B * a_pad * 2
                      + params["w1"].size * 2 + params["w2"].size * 2
                      + params["b1"].size * 4 + params["b2"].size * 4)

    out = pl.pallas_call(
        _mlp_policy_kernel,
        out_shape=jax.ShapeDtypeStruct((B, a_pad), jnp.bfloat16),
        grid_spec=pltpu.PrefetchScalarGridSpec(
            num_scalar_prefetch=0,
            grid=(grid_b,),
            in_specs=[
                # Streamed per grid step (auto double-buffered):
                pl.BlockSpec((tb, d_in), lambda i: (i, 0)),
                # Resident across all grid steps (constant block index):
                pl.BlockSpec((d_in, h_pad), lambda i: (0, 0)),
                pl.BlockSpec((1, h_pad), lambda i: (0, 0)),
                pl.BlockSpec((h_pad, a_pad), lambda i: (0, 0)),
                pl.BlockSpec((1, a_pad), lambda i: (0, 0)),
            ],
            out_specs=pl.BlockSpec((tb, a_pad), lambda i: (i, 0)),
        ),
        compiler_params=pltpu.CompilerParams(
            dimension_semantics=("parallel",),   # v7x: shard batch over 2 TCs
        ),
        cost_estimate=pl.CostEstimate(
            flops=flops, transcendentals=0, bytes_accessed=bytes_accessed),
    )(x, params["w1"], params["b1"], params["w2"], params["b2"])

    # Slice lane padding off and return f32 like the PyTorch module.
    return out[:, :n_actions].astype(jnp.float32)


# ----------------------------------------------------------------------------
# Deterministic parameter init (mimics PyTorch nn.Linear default: U(-k, k),
# k = 1/sqrt(fan_in)), done in plain JAX.
# ----------------------------------------------------------------------------
def init_policy_params(key, n_observations, n_actions, hidden_size=64,
                       frame_stack=1, bias=True):
    d_in = n_observations * frame_stack
    k1, k2, k3, k4 = jax.random.split(key, 4)
    lim1 = 1.0 / jnp.sqrt(jnp.float32(d_in))
    lim2 = 1.0 / jnp.sqrt(jnp.float32(hidden_size))
    w1 = jax.random.uniform(k1, (d_in, hidden_size), jnp.float32, -lim1, lim1)
    b1 = (jax.random.uniform(k2, (1, hidden_size), jnp.float32, -lim1, lim1)
          if bias else jnp.zeros((1, hidden_size), jnp.float32))
    w2 = jax.random.uniform(k3, (hidden_size, n_actions), jnp.float32, -lim2, lim2)
    b2 = (jax.random.uniform(k4, (1, n_actions), jnp.float32, -lim2, lim2)
          if bias else jnp.zeros((1, n_actions), jnp.float32))
    return w1, b1, w2, b2


# Pure-JAX f32 reference (same math) for a sanity check.
def _reference_forward(x, w1, b1, w2, b2):
    h = jnp.maximum(x @ w1 + b1, 0.0)
    return h @ w2 + b2


if __name__ == "__main__":
    # Shapes consistent with the module's forward:
    # state: (batch, n_observations * frame_stack)
    batch = 2
    n_observations = 16
    n_actions = 4
    hidden_size = 64          # hidden_layers=1 -> one hidden layer of hidden_sizes[0]

    key = jax.random.PRNGKey(0)
    k_x, k_p, k_xl = jax.random.split(key, 3)
    x = jax.random.normal(k_x, (batch, n_observations), dtype=jnp.float32)
    w1, b1, w2, b2 = init_policy_params(k_p, n_observations, n_actions,
                                        hidden_size=hidden_size)

    # One-time weight prep (cast + pad), reused across all forward calls.
    params = prepare_policy_params(w1, b1, w2, b2)

    # Tiny deployment shape (single grid step, partial block).
    out = jax.block_until_ready(deterministic_policy_forward(x, params))
    ref = _reference_forward(x, w1, b1, w2, b2)
    assert out.shape == (batch, n_actions)
    # bf16 MXU operands + bf16 output store -> loose tolerance vs f32 reference.
    assert jnp.allclose(out, ref, atol=5e-2, rtol=5e-2), "mismatch vs reference (small batch)"

    # Non-tile-multiple batch: exercises the 2-step grid + ragged last block.
    xl = jax.random.normal(k_xl, (300, n_observations), dtype=jnp.float32)
    out_l = jax.block_until_ready(deterministic_policy_forward(xl, params))
    ref_l = _reference_forward(xl, w1, b1, w2, b2)
    assert out_l.shape == (300, n_actions)
    assert jnp.allclose(out_l, ref_l, atol=5e-2, rtol=5e-2), "mismatch vs reference (large batch)"

    print("KERNEL_OK")
</pallas_src>

<mosaic_0001>
module attributes {stable_mosaic.version = 11 : i64} {
  func.func @_mlp_policy_kernel(%arg0: i32, %arg1: memref<16x16xf32, #tpu.memory_space<vmem>>, %arg2: memref<16x128xbf16, #tpu.memory_space<vmem>>, %arg3: memref<1x128xf32, #tpu.memory_space<vmem>>, %arg4: memref<128x128xbf16, #tpu.memory_space<vmem>>, %arg5: memref<1x128xf32, #tpu.memory_space<vmem>>, %arg6: memref<16x128xbf16, #tpu.memory_space<vmem>>) attributes {dimension_semantics = [#tpu.dimension_semantics<parallel>], iteration_bounds = array<i64: 1>, scalar_prefetch = 0 : i64, scratch_operands = 0 : i64, tpu.core_type = #tpu.core_type<tc>, window_params = [{transform_indices = @transform_0, window_bounds = array<i64: 16, 16>}, {pipeline_mode = #tpu.pipeline_mode<synchronous>, transform_indices = @transform_1, window_bounds = array<i64: 16, 128>}, {pipeline_mode = #tpu.pipeline_mode<synchronous>, transform_indices = @transform_2, window_bounds = array<i64: 1, 128>}, {pipeline_mode = #tpu.pipeline_mode<synchronous>, transform_indices = @transform_3, window_bounds = array<i64: 128, 128>}, {pipeline_mode = #tpu.pipeline_mode<synchronous>, transform_indices = @transform_4, window_bounds = array<i64: 1, 128>}, {transform_indices = @transform_5, window_bounds = array<i64: 16, 128>}]} {
    %c0 = arith.constant 0 : index
    %c0_0 = arith.constant 0 : index
    %0 = vector.load %arg1[%c0, %c0_0] : memref<16x16xf32, #tpu.memory_space<vmem>>, vector<16x16xf32>
    %1 = arith.truncf %0 : vector<16x16xf32> to vector<16x16xbf16>
    %c0_1 = arith.constant 0 : index
    %c0_2 = arith.constant 0 : index
    %2 = vector.load %arg2[%c0_1, %c0_2] : memref<16x128xbf16, #tpu.memory_space<vmem>>, vector<16x128xbf16>
    %cst = arith.constant dense<0.000000e+00> : vector<16x128xf32>
    %3 = tpu.matmul %1, %2, %cst {dimension_numbers = #tpu.dot_dimension_numbers<[1], [0], [0], [1], [0, 0, 1, 1], [], []>} : vector<16x16xbf16>, vector<16x128xbf16>, vector<16x128xf32> -> vector<16x128xf32>
    %c0_3 = arith.constant 0 : index
    %c0_4 = arith.constant 0 : index
    %4 = vector.load %arg3[%c0_3, %c0_4] : memref<1x128xf32, #tpu.memory_space<vmem>>, vector<1x128xf32>
    %5 = vector.broadcast %4 : vector<1x128xf32> to vector<16x128xf32>
    %6 = arith.addf %3, %5 : vector<16x128xf32>
    %cst_5 = arith.constant 0.000000e+00 : f32
    %7 = vector.broadcast %cst_5 : f32 to vector<16x128xf32>
    %8 = arith.maximumf %6, %7 : vector<16x128xf32>
    %9 = arith.truncf %8 : vector<16x128xf32> to vector<16x128xbf16>
    %c0_6 = arith.constant 0 : index
    %c0_7 = arith.constant 0 : index
    %10 = vector.load %arg4[%c0_6, %c0_7] : memref<128x128xbf16, #tpu.memory_space<vmem>>, vector<128x128xbf16>
    %cst_8 = arith.constant dense<0.000000e+00> : vector<16x128xf32>
    %11 = tpu.matmul %9, %10, %cst_8 {dimension_numbers = #tpu.dot_dimension_numbers<[1], [0], [0], [1], [0, 0, 1, 1], [], []>} : vector<16x128xbf16>, vector<128x128xbf16>, vector<16x128xf32> -> vector<16x128xf32>
    %c0_9 = arith.constant 0 : index
    %c0_10 = arith.constant 0 : index
    %12 = vector.load %arg5[%c0_9, %c0_10] : memref<1x128xf32, #tpu.memory_space<vmem>>, vector<1x128xf32>
    %13 = vector.broadcast %12 : vector<1x128xf32> to vector<16x128xf32>
    %14 = arith.addf %11, %13 : vector<16x128xf32>
    %15 = arith.truncf %14 : vector<16x128xf32> to vector<16x128xbf16>
    %c0_11 = arith.constant 0 : index
    %c0_12 = arith.constant 0 : index
    %16 = vector.load %arg6[%c0_11, %c0_12] : memref<16x128xbf16, #tpu.memory_space<vmem>>, vector<16x128xbf16>
    tpu.vector_store %arg6[%c0_11, %c0_12], %15 {strides = array<i32>} : memref<16x128xbf16, #tpu.memory_space<vmem>>, vector<16x128xbf16>,
    return
  }
  func.func @transform_0(%arg0: i32) -> (i32, i32) {
    %c0_i32 = arith.constant 0 : i32
    %c0_i32_0 = arith.constant 0 : i32
    return %arg0, %c0_i32 : i32, i32
  }
  func.func @transform_1(%arg0: i32) -> (i32, i32) {
    %c0_i32 = arith.constant 0 : i32
    %c0_i32_0 = arith.constant 0 : i32
    %c0_i32_1 = arith.constant 0 : i32
    return %c0_i32, %c0_i32_0 : i32, i32
  }
  func.func @transform_2(%arg0: i32) -> (i32, i32) {
    %c0_i32 = arith.constant 0 : i32
    %c0_i32_0 = arith.constant 0 : i32
    %c0_i32_1 = arith.constant 0 : i32
    return %c0_i32, %c0_i32_0 : i32, i32
  }
  func.func @transform_3(%arg0: i32) -> (i32, i32) {
    %c0_i32 = arith.constant 0 : i32
    %c0_i32_0 = arith.constant 0 : i32
    %c0_i32_1 = arith.constant 0 : i32
    return %c0_i32, %c0_i32_0 : i32, i32
  }
  func.func @transform_4(%arg0: i32) -> (i32, i32) {
    %c0_i32 = arith.constant 0 : i32
    %c0_i32_0 = arith.constant 0 : i32
    %c0_i32_1 = arith.constant 0 : i32
    return %c0_i32, %c0_i32_0 : i32, i32
  }
  func.func @transform_5(%arg0: i32) -> (i32, i32) {
    %c0_i32 = arith.constant 0 : i32
    %c0_i32_0 = arith.constant 0 : i32
    return %arg0, %c0_i32 : i32, i32
  }
}

</mosaic_0001>

<llo_original>
// kernel: tpu_custom_call.1
$region0: #{tpu_custom_call.1}
  #allocation0 [shape = 'u32[]', space=smem, size = 0x4, offset = 0x4, fixed_abs, tag = 'smem constant byte address 0x4 - core index']
  #allocation1 [shape = 'u32[144,128]{1,0:T(1,128)}', space=vmem, size = 0x12000, scoped, tag = 'internal scratch']
  %s0 = inlined_call_operand.hbm [shape: f32[2,16], index: 0, kind: input, shape index: {}]
  %s1 = inlined_call_operand.hbm [shape: bf16[16,128], index: 1, kind: input, shape index: {}]
  %s2 = inlined_call_operand.vmem [shape: f32[1,128], index: 2, kind: input, shape index: {}]
  %s3 = inlined_call_operand.hbm [shape: bf16[128,128], index: 3, kind: input, shape index: {}]
  %s4 = inlined_call_operand.vmem [shape: f32[1,128], index: 4, kind: input, shape index: {}]
  %s5 = inlined_call_operand.hbm [shape: bf16[2,128], index: 5, kind: output, shape index: {}]
  %s6 = sld [smem:[#allocation0]]
  $region42: #{tpu_custom_call.1} parent=0
    _
  %s8 = ssub.s32 1, %s6
  %s9 = scalar_select 0, %s8, %s6
  $region1: #{tpu_custom_call.1} parent=0
    #allocation2 [shape = 'u8[8192]{0}', space=vmem, size = 0x2000, scoped, tag = 'input window, operand 0, single buffered']
    #allocation3 [shape = 's32[1]{0}', space=sflag, size = 0x4, scoped, tag = 'scoped memory for tpu_custom_call.1']
    #allocation4 [shape = 's32[1]{0}', space=sflag, size = 0x4, scoped, tag = 'scoped memory for tpu_custom_call.1']
    #allocation5 [shape = 'u8[4096]{0}', space=vmem, size = 0x1000, scoped, tag = 'input window, operand 1, single buffered']
    #allocation6 [shape = 's32[1]{0}', space=sflag, size = 0x4, scoped, tag = 'scoped memory for tpu_custom_call.1']
    #allocation7 [shape = 'u8[32768]{0}', space=vmem, size = 0x8000, scoped, tag = 'input window, operand 3, single buffered']
    #allocation8 [shape = 'u8[4096]{0}', space=vmem, size = 0x1000, scoped, tag = 'output window, operand 0, single buffered']
    %10 = vsyncpa [#allocation3], 0
    %11 = vsyncpa [#allocation6], 0
    %12 = vsyncpa [#allocation4], 0
    // Predicated region
    $region2: #{tpu_custom_call.1} parent=1 // pred_check
      _
    $region3: #{tpu_custom_call.1} parent=1 // pred_check_branch
      %14 = sbr.rel (0) target = $region5
    $region4: #{tpu_custom_call.1} parent=1 // pred_region
      %s16 = ssub.s32 256, 32
      %17 = vsyncadd [#allocation3], %s16
      %s18 = sshll.u32 [#allocation2], 4
      %s19 = int_to_ptr.vmem [resolvable:$true] %s18
      %24 = dma.hbm_to_vmem [thread:$0]  %s0, 32, %s19, [#allocation3], 32, 32, 2
    $region5: #{tpu_custom_call.1} parent=1 // pred_fallthru
      _
    // Predicated region
    $region6: #{tpu_custom_call.1} parent=1 // pred_check
      _
    $region7: #{tpu_custom_call.1} parent=1 // pred_check_branch
      %26 = sbr.rel (0) target = $region9
    $region8: #{tpu_custom_call.1} parent=1 // pred_region
      %s28 = ssub.s32 128, 128
      %29 = vsyncadd [#allocation6], %s28
      %s30 = sshll.u32 [#allocation5], 4
      %s31 = int_to_ptr.vmem [resolvable:$true] %s30
      %36 = dma.hbm_to_vmem [thread:$0]  %s1, 128, %s31, [#allocation6], 64, 64, 4
    $region9: #{tpu_custom_call.1} parent=1 // pred_fallthru
      _
    // Predicated region
    $region10: #{tpu_custom_call.1} parent=1 // pred_check
      _
    $region11: #{tpu_custom_call.1} parent=1 // pred_check_branch
      %38 = sbr.rel (0) target = $region13
    $region12: #{tpu_custom_call.1} parent=1 // pred_region
      _
    $region13: #{tpu_custom_call.1} parent=1 // pred_fallthru
      _
    // Predicated region
    $region14: #{tpu_custom_call.1} parent=1 // pred_check
      _
    $region15: #{tpu_custom_call.1} parent=1 // pred_check_branch
      %40 = sbr.rel (0) target = $region17
    $region16: #{tpu_custom_call.1} parent=1 // pred_region
      %s42 = ssub.s32 1024, 1024
      %43 = vsyncadd [#allocation6], %s42
      %s44 = sshll.u32 [#allocation7], 4
      %s45 = int_to_ptr.vmem [resolvable:$true] %s44
      %50 = dma.hbm_to_vmem [thread:$0]  %s3, 1024, %s45, [#allocation6], 64, 64, 4
    $region17: #{tpu_custom_call.1} parent=1 // pred_fallthru
      _
    // Predicated region
    $region18: #{tpu_custom_call.1} parent=1 // pred_check
      _
    $region19: #{tpu_custom_call.1} parent=1 // pred_check_branch
      %52 = sbr.rel (0) target = $region21
    $region20: #{tpu_custom_call.1} parent=1 // pred_region
      _
    $region21: #{tpu_custom_call.1} parent=1 // pred_fallthru
      _
    // Predicated region
    $region22: #{tpu_custom_call.1} parent=1 // pred_check
      _
    $region23: #{tpu_custom_call.1} parent=1 // pred_check_branch
      %54 = sbr.rel (0) target = $region25
    $region24: #{tpu_custom_call.1} parent=1 // pred_region
      %55 = dma.done [#allocation3], 256
    $region25: #{tpu_custom_call.1} parent=1 // pred_fallthru
      _
    // Predicated region
    $region26: #{tpu_custom_call.1} parent=1 // pred_check
      _
    $region27: #{tpu_custom_call.1} parent=1 // pred_check_branch
      %57 = sbr.rel (0) target = $region29
    $region28: #{tpu_custom_call.1} parent=1 // pred_region
      %58 = dma.done [#allocation6], 128
    $region29: #{tpu_custom_call.1} parent=1 // pred_fallthru
      _
    // Predicated region
    $region30: #{tpu_custom_call.1} parent=1 // pred_check
      _
    $region31: #{tpu_custom_call.1} parent=1 // pred_check_branch
      %60 = sbr.rel (0) target = $region33
    $region32: #{tpu_custom_call.1} parent=1 // pred_region
      %61 = dma.done [#allocation6], 1024
    $region33: #{tpu_custom_call.1} parent=1 // pred_fallthru
      _
    %v63 = vld [vmem:[#allocation2] sm:$0xff]
    %v64 = vld [vmem:[#allocation2 + $0x8] sm:$0xff]
    %v65 = vpack.c.bf16 %v64, %v63
    %v66 = vld [vmem:[#allocation5] sm:$0xf]
    %v67 = vld [vmem:[#allocation5 + $0x4] sm:$0xf]
    %v68 = vld [vmem:[%s2] sm:$0x1]
    %v70 = vlaneseq
    %v71 = vshrl.u32 %v70, 7
    %v72 = vsub.s32 0, %v71
    %v73 = vrot.slane %v68, %v72
    %v77 = vunpack.c.l.b16 %v66
    %v78 = vunpack.c.l.b16 %v67
    %v79 = vpack.c.b16 %v78, %v77
    %vm81 = vcmask 130048
    %v83 = vsel %vm81, %v65, 0
    %85 = vmatprep.subr.bf16.mxu0 0
    %86 = vmatpush1.bf16.msra.mxu0 0
    %87 = vmatprep.subr.bf16.mxu0 0
    %88 = vmatpush1.bf16.msra.mxu0 0
    %89 = vmatprep.subr.bf16.mxu0 0
    %90 = vmatpush1.bf16.msra.mxu0 0
    %91 = vmatprep.subr.bf16.mxu0 0
    %92 = vmatpush1.bf16.msra.mxu0 0
    %93 = vmatprep.subr.bf16.mxu0 0
    %94 = vmatpush1.bf16.msra.mxu0 0
    %95 = vmatprep.subr.bf16.mxu0 0
    %96 = vmatpush1.bf16.msra.mxu0 0
    %97 = vmatprep.subr.bf16.mxu0 0
    %98 = vmatpush1.bf16.msra.mxu0 0
    %99 = vmatprep.subr.bf16.mxu0 0
    %100 = vmatpush1.bf16.msra.mxu0 %v79
    %101 = vmatprep.subr.bf16.mxu0 0
    %102 = vmatpush2.bf16.msra.mxu0 0
    %103 = vmatprep.subr.bf16.mxu0 0
    %104 = vmatpush2.bf16.msra.mxu0 0
    %105 = vmatprep.subr.bf16.mxu0 0
    %106 = vmatpush2.bf16.msra.mxu0 0
    %107 = vmatprep.subr.bf16.mxu0 0
    %108 = vmatpush2.bf16.msra.mxu0 0
    %109 = vmatprep.subr.bf16.mxu0 0
    %110 = vmatpush2.bf16.msra.mxu0 0
    %111 = vmatprep.subr.bf16.mxu0 0
    %112 = vmatpush2.bf16.msra.mxu0 0
    %113 = vmatprep.subr.bf16.mxu0 0
    %114 = vmatpush2.bf16.msra.mxu0 0
    %115 = vmatprep.subr.bf16.mxu0 0
    %116 = vmatpush2.bf16.msra.mxu0 0
    %117 = vmatprep.mubr.bf16.mxu0 0
    %118 = vmatmul.mubr.bf16.gmra.mxu0 %v83
    %v119 = vpop.f32.mrf.mxu0
    %v120 = vadd.f32 %v73, %v119
    %v121 = vpop.f32.mrf.mxu0
    %v122 = vpop.f32.mrf.mxu0
    %v123 = vadd.f32 %v73, %v122
    %v124 = vpop.f32.mrf.mxu0
    %125 = vdwg.mxu0
    %v126 = vmax.f32 %v120, 0.0
    %v127 = vmax.f32 %v123, 0.0
    %v128 = vpack.c.bf16 %v127, %v126
    %v129 = vld [vmem:[#allocation7] sm:$0xf]
    %v130 = vld [vmem:[#allocation7 + $0x4] sm:$0xf]
    %v131 = vld [vmem:[#allocation7 + $0x8] sm:$0xf]
    %v132 = vld [vmem:[#allocation7 + $0xc] sm:$0xf]
    %v133 = vld [vmem:[#allocation7 + $0x10] sm:$0xf]
    %v134 = vld [vmem:[#allocation7 + $0x14] sm:$0xf]
    %v135 = vld [vmem:[#allocation7 + $0x18] sm:$0xf]
    %v136 = vld [vmem:[#allocation7 + $0x1c] sm:$0xf]
    %v137 = vld [vmem:[#allocation7 + $0x20] sm:$0xf]
    %v138 = vld [vmem:[#allocation7 + $0x24] sm:$0xf]
    %v139 = vld [vmem:[#allocation7 + $0x28] sm:$0xf]
    %v140 = vld [vmem:[#allocation7 + $0x2c] sm:$0xf]
    %v141 = vld [vmem:[#allocation7 + $0x30] sm:$0xf]
    %v142 = vld [vmem:[#allocation7 + $0x34] sm:$0xf]
    %v143 = vld [vmem:[#allocation7 + $0x38] sm:$0xf]
    %v144 = vld [vmem:[#allocation7 + $0x3c] sm:$0xf]
    %v145 = vld [vmem:[%s4] sm:$0x1]
    %v147 = vlaneseq
    %v148 = vshrl.u32 %v147, 7
    %v149 = vsub.s32 0, %v148
    %v150 = vrot.slane %v145, %v149
    %v168 = vunpack.c.l.b16 %v129
    %v169 = vunpack.c.l.b16 %v130
    %v170 = vunpack.c.l.b16 %v131
    %v171 = vunpack.c.l.b16 %v132
    %v172 = vunpack.c.l.b16 %v133
    %v173 = vunpack.c.l.b16 %v134
    %v174 = vunpack.c.l.b16 %v135
    %v175 = vunpack.c.l.b16 %v136
    %v176 = vunpack.c.l.b16 %v137
    %v177 = vunpack.c.l.b16 %v138
    %v178 = vunpack.c.l.b16 %v139
    %v179 = vunpack.c.l.b16 %v140
    %v180 = vunpack.c.l.b16 %v141
    %v181 = vunpack.c.l.b16 %v142
    %v182 = vunpack.c.l.b16 %v143
    %v183 = vunpack.c.l.b16 %v144
    %v184 = vpack.c.b16 %v169, %v168
    %v185 = vpack.c.b16 %v171, %v170
    %v186 = vpack.c.b16 %v173, %v172
    %v187 = vpack.c.b16 %v175, %v174
    %v188 = vpack.c.b16 %v177, %v176
    %v189 = vpack.c.b16 %v179, %v178
    %v190 = vpack.c.b16 %v181, %v180
    %v191 = vpack.c.b16 %v183, %v182
    %200 = vmatprep.subr.bf16.mxu0 0
    %201 = vmatpush1.bf16.msra.mxu0 %v191
    %202 = vmatprep.subr.bf16.mxu0 0
    %203 = vmatpush1.bf16.msra.mxu0 %v190
    %204 = vmatprep.subr.bf16.mxu0 0
    %205 = vmatpush1.bf16.msra.mxu0 %v189
    %206 = vmatprep.subr.bf16.mxu0 0
    %207 = vmatpush1.bf16.msra.mxu0 %v188
    %208 = vmatprep.subr.bf16.mxu0 0
    %209 = vmatpush1.bf16.msra.mxu0 %v187
    %210 = vmatprep.subr.bf16.mxu0 0
    %211 = vmatpush1.bf16.msra.mxu0 %v186
    %212 = vmatprep.subr.bf16.mxu0 0
    %213 = vmatpush1.bf16.msra.mxu0 %v185
    %214 = vmatprep.subr.bf16.mxu0 0
    %215 = vmatpush1.bf16.msra.mxu0 %v184
    %216 = vmatprep.subr.bf16.mxu0 0
    %217 = vmatpush2.bf16.msra.mxu0 0
    %218 = vmatprep.subr.bf16.mxu0 0
    %219 = vmatpush2.bf16.msra.mxu0 0
    %220 = vmatprep.subr.bf16.mxu0 0
    %221 = vmatpush2.bf16.msra.mxu0 0
    %222 = vmatprep.subr.bf16.mxu0 0
    %223 = vmatpush2.bf16.msra.mxu0 0
    %224 = vmatprep.subr.bf16.mxu0 0
    %225 = vmatpush2.bf16.msra.mxu0 0
    %226 = vmatprep.subr.bf16.mxu0 0
    %227 = vmatpush2.bf16.msra.mxu0 0
    %228 = vmatprep.subr.bf16.mxu0 0
    %229 = vmatpush2.bf16.msra.mxu0 0
    %230 = vmatprep.subr.bf16.mxu0 0
    %231 = vmatpush2.bf16.msra.mxu0 0
    %232 = vmatprep.mubr.bf16.mxu0 0
    %233 = vmatmul.mubr.bf16.gmra.mxu0 %v128
    %v234 = vpop.f32.mrf.mxu0
    %v235 = vadd.f32 %v150, %v234
    %v236 = vpop.f32.mrf.mxu0
    %v237 = vpop.f32.mrf.mxu0
    %v238 = vadd.f32 %v150, %v237
    %v239 = vpop.f32.mrf.mxu0
    %240 = vdwg.mxu0
    %v241 = vpack.c.bf16 %v238, %v235
    %v243 = vcombine.high %v241, %v241
    %v245 = vunpack.c.l.s4 1966171168
    %v246 = vunpack.c.0.s8 %v245
    %v247 = vlaneseq
    %v248 = vshrl.u32 %v247, 7
    %v249 = vsub.s32 %v246, %v248
    %v250 = vrot.slane %v241, %v249
    %v252 = vunpack.c.l.s4 1966171168
    %v253 = vunpack.c.0.s8 %v252
    %v254 = vlaneseq
    %v255 = vshrl.u32 %v254, 7
    %v256 = vsub.s32 %v253, %v255
    %v257 = vrot.slane %v243, %v256
    %v258 = vcombine.high %v250, %v250
    %v259 = vcombine.high %v257, %v257
    %v261 = vunpack.c.l.s4 1966171168
    %v262 = vunpack.c.0.s8 %v261
    %v263 = vlaneseq
    %v264 = vshrl.u32 %v263, 7
    %v265 = vsub.s32 %v262, %v264
    %v266 = vrot.slane %v250, %v265
    %v268 = vunpack.c.l.s4 1966171168
    %v269 = vunpack.c.0.s8 %v268
    %v270 = vlaneseq
    %v271 = vshrl.u32 %v270, 7
    %v272 = vsub.s32 %v269, %v271
    %v273 = vrot.slane %v257, %v272
    %v275 = vunpack.c.l.s4 1966171168
    %v276 = vunpack.c.0.s8 %v275
    %v277 = vlaneseq
    %v278 = vshrl.u32 %v277, 7
    %v279 = vsub.s32 %v276, %v278
    %v280 = vrot.slane %v258, %v279
    %v282 = vunpack.c.l.s4 1966171168
    %v283 = vunpack.c.0.s8 %v282
    %v284 = vlaneseq
    %v285 = vshrl.u32 %v284, 7
    %v286 = vsub.s32 %v283, %v285
    %v287 = vrot.slane %v259, %v286
    %v288 = vcombine.high %v266, %v266
    %v289 = vcombine.high %v273, %v273
    %v290 = vcombine.high %v280, %v280
    %v291 = vcombine.high %v287, %v287
    %300 = vst [vmem:[#allocation8] sm:$0x1] %v266
    %301 = vst [vmem:[#allocation8 + $0x1] sm:$0x1] %v280
    %302 = vst [vmem:[#allocation8 + $0x2] sm:$0x1] %v288
    %303 = vst [vmem:[#allocation8 + $0x3] sm:$0x1] %v290
    %304 = vst [vmem:[#allocation8 + $0x4] sm:$0x1] %v273
    %305 = vst [vmem:[#allocation8 + $0x5] sm:$0x1] %v287
    %306 = vst [vmem:[#allocation8 + $0x6] sm:$0x1] %v289
    %307 = vst [vmem:[#allocation8 + $0x7] sm:$0x1] %v291
    // Predicated region
    $region34: #{tpu_custom_call.1} parent=1 // pred_check
      _
    $region35: #{tpu_custom_call.1} parent=1 // pred_check_branch
      %309 = sbr.rel (0) target = $region37
    $region36: #{tpu_custom_call.1} parent=1 // pred_region
      %s311 = ssub.s32 128, 16
      %312 = vsyncadd [#allocation4], %s311
      %s313 = sshll.u32 [#allocation8], 4
      %s314 = int_to_ptr.vmem [resolvable:$true] %s313
      %319 = dma.vmem_to_hbm [thread:$0]  %s314, 16, %s5, [#allocation4], 16, 16, 1
    $region37: #{tpu_custom_call.1} parent=1 // pred_fallthru
      _
    // Predicated region
    $region38: #{tpu_custom_call.1} parent=1 // pred_check
      _
    $region39: #{tpu_custom_call.1} parent=1 // pred_check_branch
      %321 = sbr.rel (0) target = $region41
    $region40: #{tpu_custom_call.1} parent=1 // pred_region
      %322 = dma.done [#allocation4], 128
    $region41: #{tpu_custom_call.1} parent=1 // pred_fallthru
      _
    %323 = vsyncpa [#allocation3], 1
    %324 = vsyncpa [#allocation6], 1
    %325 = vsyncpa [#allocation4], 1

</llo_original>
